<compile_context>
chip_gen: v5e
topology: v5e:2x2
jax: 0.10.0
libtpu: 0.0.40
codegen_flags: <defaults>
</compile_context>

<pallas_src>
import jax
import jax.numpy as jnp
from jax.experimental import pallas as pl
from jax.experimental.pallas import tpu as pltpu


def pooler_kernel(x_ref, w_ref, b_ref, o_ref):
    # x_ref: [tb, H]   bf16  (first-token activations, batch tile, resident over j)
    # w_ref: [H, tn]   bf16  (pre-transposed nn.Linear weight, streamed column tile)
    # b_ref: [1, tn]   f32
    # o_ref: [tb, tn]  out dtype
    y = jnp.dot(x_ref[...], w_ref[...], preferred_element_type=jnp.float32)
    y = y + b_ref[...]
    o_ref[...] = jnp.tanh(y).astype(o_ref.dtype)


def _round_up(x, m):
    return (x + m - 1) // m * m


def bert_pooler(hidden_states, weight, bias, *, max_block_b=512, out_dtype=None):
    """hidden_states: [B, S, H]; weight: [H, H] (nn.Linear [out, in] layout);
    bias: [H]  ->  [B, H]."""
    B, S, H = hidden_states.shape
    out_dtype = hidden_states.dtype if out_dtype is None else out_dtype
    out_itemsize = jnp.dtype(out_dtype).itemsize

    # --- weight prep (in a real model this is folded into param loading) ----
    w = weight.T.astype(jnp.bfloat16)             # [H_in, H_out], bf16
    b2d = bias.reshape(1, H).astype(jnp.float32)  # [1, H], f32

    # --- activation prep: first-token slice + bf16 cast (one fused XLA op) --
    x = hidden_states[:, 0].astype(jnp.bfloat16)  # [B, H]

    # --- batch tiling (minimal padding) -------------------------------------
    if B <= max_block_b:
        tb, b_pad = B, B                      # block == full array: always legal
    else:
        n_b = pl.cdiv(B, max_block_b)
        tb = _round_up(pl.cdiv(B, n_b), 8)    # sublane aligned, minimal padding
        b_pad = _round_up(B, tb)
        if b_pad != B:
            x = jnp.pad(x, ((0, b_pad - B), (0, 0)))

    # --- output-feature tiling: stream the weight in lane-dense column tiles
    if H % 512 == 0:
        tn = 512
    elif H % 256 == 0:
        tn = 256
    elif H % 128 == 0:
        tn = 128
    else:
        tn = H                                # tiny/irregular H: full-dim block

    n_b_tiles = b_pad // tb
    grid = (n_b_tiles, H // tn)

    # --- per-step VMEM footprint (double-buffered streams) ------------------
    vmem_bytes = 2 * (tb * H * 2 + H * tn * 2 + tn * 4 + tb * tn * out_itemsize)
    vmem_limit = min(max(vmem_bytes + (4 << 20), 16 << 20), 48 << 20)

    cost = pl.CostEstimate(
        flops=2 * b_pad * H * H,
        transcendentals=b_pad * H,  # tanh
        bytes_accessed=(n_b_tiles * H * H * 2   # weight streamed once per batch tile
                        + b_pad * H * 2          # x (bf16)
                        + H * 4                  # bias
                        + b_pad * H * out_itemsize),
    )

    out = pl.pallas_call(
        pooler_kernel,
        out_shape=jax.ShapeDtypeStruct((b_pad, H), out_dtype),
        grid_spec=pl.GridSpec(
            grid=grid,
            in_specs=[
                pl.BlockSpec((tb, H), lambda i, j: (i, 0)),   # x: resident across j
                pl.BlockSpec((H, tn), lambda i, j: (0, j)),   # weight: streamed tiles
                pl.BlockSpec((1, tn), lambda i, j: (0, j)),   # bias tile
            ],
            out_specs=pl.BlockSpec((tb, tn), lambda i, j: (i, j)),
        ),
        compiler_params=pltpu.CompilerParams(
            # v7x: shard batch and feature tiles across the 2 TensorCores.
            dimension_semantics=("parallel", "parallel"),
            vmem_limit_bytes=vmem_limit,
        ),
        cost_estimate=cost,
    )(x, w, b2d)

    return out[:B] if b_pad != B else out


if __name__ == "__main__":
    B, S, H = 2, 8, 32   # small shapes consistent with the module
    key = jax.random.PRNGKey(0)
    k1, k2, k3 = jax.random.split(key, 3)

    hidden_states = jax.random.normal(k1, (B, S, H), dtype=jnp.float32)
    # deterministic synthetic parameters (same shapes as nn.Linear(H, H))
    weight = jax.random.normal(k2, (H, H), dtype=jnp.float32) * 0.02
    bias = jax.random.normal(k3, (H,), dtype=jnp.float32) * 0.02

    out = bert_pooler(hidden_states, weight, bias)
    out = jax.block_until_ready(out)

    # f32 reference; kernel uses bf16 operands with f32 accumulation,
    # so compare with a bf16-appropriate tolerance.
    ref = jnp.tanh(hidden_states[:, 0] @ weight.T + bias)
    assert out.shape == (B, H)
    assert jnp.allclose(out, ref, atol=1e-2, rtol=1e-2), \
        float(jnp.max(jnp.abs(out - ref)))
    print("KERNEL_OK")
</pallas_src>

<mosaic_0001>
module attributes {stable_mosaic.version = 11 : i64} {
  func.func @pooler_kernel(%arg0: i32, %arg1: i32, %arg2: memref<2x32xbf16, #tpu.memory_space<vmem>>, %arg3: memref<32x32xbf16, #tpu.memory_space<vmem>>, %arg4: memref<1x32xf32, #tpu.memory_space<vmem>>, %arg5: memref<2x32xf32, #tpu.memory_space<vmem>>) attributes {dimension_semantics = [#tpu.dimension_semantics<parallel>, #tpu.dimension_semantics<parallel>], iteration_bounds = array<i64: 1, 1>, scalar_prefetch = 0 : i64, scratch_operands = 0 : i64, tpu.core_type = #tpu.core_type<tc>, window_params = [{transform_indices = @transform_0, window_bounds = array<i64: 2, 32>}, {transform_indices = @transform_1, window_bounds = array<i64: 32, 32>}, {transform_indices = @transform_2, window_bounds = array<i64: 1, 32>}, {transform_indices = @transform_3, window_bounds = array<i64: 2, 32>}]} {
    %c0 = arith.constant 0 : index
    %c0_0 = arith.constant 0 : index
    %0 = vector.load %arg2[%c0, %c0_0] : memref<2x32xbf16, #tpu.memory_space<vmem>>, vector<2x32xbf16>
    %c0_1 = arith.constant 0 : index
    %c0_2 = arith.constant 0 : index
    %1 = vector.load %arg3[%c0_1, %c0_2] : memref<32x32xbf16, #tpu.memory_space<vmem>>, vector<32x32xbf16>
    %cst = arith.constant dense<0.000000e+00> : vector<2x32xf32>
    %2 = tpu.matmul %0, %1, %cst {dimension_numbers = #tpu.dot_dimension_numbers<[1], [0], [0], [1], [0, 0, 1, 1], [], []>} : vector<2x32xbf16>, vector<32x32xbf16>, vector<2x32xf32> -> vector<2x32xf32>
    %c0_3 = arith.constant 0 : index
    %c0_4 = arith.constant 0 : index
    %3 = vector.load %arg4[%c0_3, %c0_4] : memref<1x32xf32, #tpu.memory_space<vmem>>, vector<1x32xf32>
    %4 = vector.broadcast %3 : vector<1x32xf32> to vector<2x32xf32>
    %5 = arith.addf %2, %4 : vector<2x32xf32>
    %6 = math.tanh %5 : vector<2x32xf32>
    %c0_5 = arith.constant 0 : index
    %c0_6 = arith.constant 0 : index
    %7 = vector.load %arg5[%c0_5, %c0_6] : memref<2x32xf32, #tpu.memory_space<vmem>>, vector<2x32xf32>
    tpu.vector_store %arg5[%c0_5, %c0_6], %6 {strides = array<i32>} : memref<2x32xf32, #tpu.memory_space<vmem>>, vector<2x32xf32>,
    return
  }
  func.func @transform_0(%arg0: i32, %arg1: i32) -> (i32, i32) {
    %c0_i32 = arith.constant 0 : i32
    %c0_i32_0 = arith.constant 0 : i32
    return %arg0, %c0_i32 : i32, i32
  }
  func.func @transform_1(%arg0: i32, %arg1: i32) -> (i32, i32) {
    %c0_i32 = arith.constant 0 : i32
    %c0_i32_0 = arith.constant 0 : i32
    return %c0_i32, %arg1 : i32, i32
  }
  func.func @transform_2(%arg0: i32, %arg1: i32) -> (i32, i32) {
    %c0_i32 = arith.constant 0 : i32
    %c0_i32_0 = arith.constant 0 : i32
    return %c0_i32, %arg1 : i32, i32
  }
  func.func @transform_3(%arg0: i32, %arg1: i32) -> (i32, i32) {
    %c0_i32 = arith.constant 0 : i32
    return %arg0, %arg1 : i32, i32
  }
}

</mosaic_0001>

<llo_original>
// kernel: tpu_custom_call.1
$region0: #{tpu_custom_call.1}
  #allocation0 [shape = 'u32[]', space=smem, size = 0x4, offset = 0x4, fixed_abs, tag = 'smem constant byte address 0x4 - core index']
  #allocation1 [shape = 'u32[72,128]{1,0:T(1,128)}', space=vmem, size = 0x9000, scoped, tag = 'internal scratch']
  %s0 = inlined_call_operand.hbm [shape: bf16[2,32], index: 0, kind: input, shape index: {}]
  %s1 = inlined_call_operand.hbm [shape: bf16[32,32], index: 1, kind: input, shape index: {}]
  %s2 = inlined_call_operand.vmem [shape: f32[1,32], index: 2, kind: input, shape index: {}]
  %s3 = inlined_call_operand.hbm [shape: f32[2,32], index: 3, kind: output, shape index: {}]
  %s4 = sld [smem:[#allocation0]]
  $region30: #{tpu_custom_call.1} parent=0
    _
  %s6 = ssub.s32 1, %s4
  %s7 = scalar_select 0, %s6, %s4
  $region1: #{tpu_custom_call.1} parent=0
    #allocation2 [shape = 'u8[512]{0}', space=vmem, size = 0x400, scoped, tag = 'input window, operand 0, single buffered']
    #allocation3 [shape = 's32[1]{0}', space=sflag, size = 0x4, scoped, tag = 'scoped memory for tpu_custom_call.1']
    #allocation4 [shape = 's32[1]{0}', space=sflag, size = 0x4, scoped, tag = 'scoped memory for tpu_custom_call.1']
    #allocation5 [shape = 'u8[8192]{0}', space=vmem, size = 0x2000, scoped, tag = 'input window, operand 1, single buffered']
    #allocation6 [shape = 's32[1]{0}', space=sflag, size = 0x4, scoped, tag = 'scoped memory for tpu_custom_call.1']
    #allocation7 [shape = 'u8[1024]{0}', space=vmem, size = 0x400, scoped, tag = 'output window, operand 0, single buffered']
    %8 = vsyncpa [#allocation3], 0
    %9 = vsyncpa [#allocation6], 0
    %10 = vsyncpa [#allocation4], 0
    // Predicated region
    $region2: #{tpu_custom_call.1} parent=1 // pred_check
      _
    $region3: #{tpu_custom_call.1} parent=1 // pred_check_branch
      %12 = sbr.rel (0) target = $region5
    $region4: #{tpu_custom_call.1} parent=1 // pred_region
      %14 = vsyncadd [#allocation3], 0
      %s16 = sshll.u32 %s0, 4
      %s17 = int_to_ptr.hbm [resolvable:$true] %s16
      %s18 = sshll.u32 [#allocation2], 4
      %s19 = int_to_ptr.vmem [resolvable:$true] %s18
      %21 = dma.hbm_to_vmem [thread:$0]  %s17, 16, %s19, [#allocation3]
    $region5: #{tpu_custom_call.1} parent=1 // pred_fallthru
      _
    // Predicated region
    $region6: #{tpu_custom_call.1} parent=1 // pred_check
      _
    $region7: #{tpu_custom_call.1} parent=1 // pred_check_branch
      %23 = sbr.rel (0) target = $region9
    $region8: #{tpu_custom_call.1} parent=1 // pred_region
      %25 = vsyncadd [#allocation6], 0
      %s26 = sshll.u32 %s1, 4
      %s27 = int_to_ptr.hbm [resolvable:$true] %s26
      %s28 = sshll.u32 [#allocation5], 4
      %s29 = int_to_ptr.vmem [resolvable:$true] %s28
      %34 = dma.hbm_to_vmem [thread:$0]  %s27, 256, %s29, [#allocation6], 64, 64, 4
    $region9: #{tpu_custom_call.1} parent=1 // pred_fallthru
      _
    // Predicated region
    $region10: #{tpu_custom_call.1} parent=1 // pred_check
      _
    $region11: #{tpu_custom_call.1} parent=1 // pred_check_branch
      %36 = sbr.rel (0) target = $region13
    $region12: #{tpu_custom_call.1} parent=1 // pred_region
      _
    $region13: #{tpu_custom_call.1} parent=1 // pred_fallthru
      _
    // Predicated region
    $region14: #{tpu_custom_call.1} parent=1 // pred_check
      _
    $region15: #{tpu_custom_call.1} parent=1 // pred_check_branch
      %38 = sbr.rel (0) target = $region17
    $region16: #{tpu_custom_call.1} parent=1 // pred_region
      %40 = dma.done [#allocation3], 16
    $region17: #{tpu_custom_call.1} parent=1 // pred_fallthru
      _
    // Predicated region
    $region18: #{tpu_custom_call.1} parent=1 // pred_check
      _
    $region19: #{tpu_custom_call.1} parent=1 // pred_check_branch
      %42 = sbr.rel (0) target = $region21
    $region20: #{tpu_custom_call.1} parent=1 // pred_region
      %44 = dma.done [#allocation6], 256
    $region21: #{tpu_custom_call.1} parent=1 // pred_fallthru
      _
    %v46 = vld [vmem:[#allocation2] sm:$0x1]
    %v47 = vld [vmem:[#allocation5] sm:$0xf]
    %v48 = vld [vmem:[#allocation5 + $0x4] sm:$0xf]
    %v49 = vld [vmem:[#allocation5 + $0x8] sm:$0xf]
    %v50 = vld [vmem:[#allocation5 + $0xc] sm:$0xf]
    %v51 = vld [vmem:[%s2] sm:$0x1]
    %v53 = vperm.slane %v51, 0
    %v59 = vunpack.c.l.b16 %v47
    %v60 = vunpack.c.l.b16 %v48
    %v61 = vunpack.c.l.b16 %v49
    %v62 = vunpack.c.l.b16 %v50
    %v63 = vpack.c.b16 %v60, %v59
    %v64 = vpack.c.b16 %v62, %v61
    %vm67 = vcmask 261120
    %v69 = vsel %vm67, %v46, 0
    %71 = vmatpush.bf16.msra.mxu0 0
    %72 = vmatpush.bf16.msra.mxu0 0
    %73 = vmatpush.bf16.msra.mxu0 0
    %74 = vmatpush.bf16.msra.mxu0 0
    %75 = vmatpush.bf16.msra.mxu0 0
    %76 = vmatpush.bf16.msra.mxu0 0
    %77 = vmatpush.bf16.msra.mxu0 %v64
    %78 = vmatpush.bf16.msra.mxu0 %v63
    %79 = vmatmul.bf16.gmra.mxu0 %v69
    %v80 = vpop.f32.mrf.mxu0
    %v81 = vadd.f32 %v53, %v80
    %v82 = vpop.f32.mrf.mxu0
    %83 = vdwg.mxu0
    %v84 = vtanh.pop %v81
    %vm85 = vcmask 254976
    %86 = vst.msk [vmem:[#allocation7] sm:$0x3] %vm85, %v84
    // Predicated region
    $region22: #{tpu_custom_call.1} parent=1 // pred_check
      _
    $region23: #{tpu_custom_call.1} parent=1 // pred_check_branch
      %88 = sbr.rel (0) target = $region25
    $region24: #{tpu_custom_call.1} parent=1 // pred_region
      %90 = vsyncadd [#allocation4], 0
      %s92 = sshll.u32 [#allocation7], 4
      %s93 = int_to_ptr.vmem [resolvable:$true] %s92
      %s94 = sshll.u32 %s3, 4
      %s95 = int_to_ptr.hbm [resolvable:$true] %s94
      %97 = dma.vmem_to_hbm [thread:$0]  %s93, 32, %s95, [#allocation4]
    $region25: #{tpu_custom_call.1} parent=1 // pred_fallthru
      _
    // Predicated region
    $region26: #{tpu_custom_call.1} parent=1 // pred_check
      _
    $region27: #{tpu_custom_call.1} parent=1 // pred_check_branch
      %99 = sbr.rel (0) target = $region29
    $region28: #{tpu_custom_call.1} parent=1 // pred_region
      %101 = dma.done [#allocation4], 32
    $region29: #{tpu_custom_call.1} parent=1 // pred_fallthru
      _
    %102 = vsyncpa [#allocation3], 1
    %103 = vsyncpa [#allocation6], 1
    %104 = vsyncpa [#allocation4], 1

</llo_original>
